<compile_context>
chip_gen: v5e
topology: v5e:2x2
jax: 0.10.0
libtpu: 0.0.40
codegen_flags: <defaults>
</compile_context>

<pallas_src>
import functools

import jax
import jax.numpy as jnp
from jax.experimental import pallas as pl
from jax.experimental.pallas import tpu as pltpu


# ----------------------------- tile sizing ---------------------------------
def _round_up(x, m):
    return -(-x // m) * m


def _round_down(x, m):
    return (x // m) * m


def _cdiv(a, b):
    return -(-a // b)


def _vmem_capacity_bytes():
    try:
        cap = getattr(pltpu.get_tpu_info(), "vmem_capacity_bytes", None)
        if cap:
            return int(cap)
    except Exception:
        pass
    return 64 * 1024 * 1024  # conservative (v7x-sized) fallback


def _choose_tiles(n, l, p_bytes, y_bytes, budget_bytes):
    """Return (tile_n, tile_l, n_pad, l_pad) sized for the VMEM budget."""
    # per tile element: 2 double-buffered inputs + ~6 f32 live intermediates
    per_elem = 2 * (p_bytes + y_bytes) + 6 * 4
    max_elems = max(budget_bytes // per_elem, 8 * 128)

    # --- label (lane) axis: keep rows long => contiguous HBM DMAs ---
    if l <= 128:
        tile_l = l  # full-dim block (no 128-multiple rule applies)
    else:
        l128 = _round_up(l, 128)
        tile_l = min(l128, 2048)
        # v7x megacore: keep >=2 parallel label tiles while rows stay >=512 wide
        if l128 >= 1024 and l128 // tile_l < 2:
            tile_l = max(512, _round_down(l128 // 2, 128))

    # --- sample (sublane) axis: full N if it fits the budget, else tile ---
    n8 = _round_up(n, 8)
    if n8 * tile_l <= max_elems:
        tile_n = n8
    else:
        tn_max = max(_round_down(max_elems // tile_l, 8), 8)
        num_nt = _cdiv(n8, tn_max)
        tile_n = _round_up(_cdiv(n8, num_nt), 8)  # balanced N tiles, no 2x pad

    l_pad = tile_l if l <= 128 else _round_up(l, tile_l)
    n_pad = _round_up(n, tile_n)

    # --- keep >=4 pipeline steps once per-step DMAs are already MiB-class ---
    while ((l_pad // tile_l) * (n_pad // tile_n) < 4 and tile_l >= 256
           and tile_n * tile_l * (p_bytes + y_bytes) >= (2 << 20)):
        tile_l = max(128, _round_down(tile_l // 2, 128))
        l_pad = _round_up(l, tile_l)

    return tile_n, tile_l, n_pad, l_pad


# ------------------------------- kernel ------------------------------------
def _fec_tile_kernel(p_ref, y_ref, out_ref,
                     s_ol, s_fpo, s_fno, s_tp, s_pp, s_py,
                     *, alpha, gamma, thr, n_real, n_pad_rows):
    nj = pl.program_id(1)  # sample-tile index (innermost, "arbitrary")

    @pl.when(nj == 0)
    def _init():
        for acc in (s_ol, s_fpo, s_fno, s_tp, s_pp, s_py):
            acc[...] = jnp.zeros_like(acc)

    p = p_ref[...].astype(jnp.float32)
    pos_p = p > thr
    # y is only compared: exact for hard 0/1 labels in any dtype (bf16/int8/f32).
    pos_y = y_ref[...] > thr

    # Single-log BCE with torch's log clamp at -100 (hard 0/1 label fast path).
    oloss = -jnp.maximum(jnp.log(jnp.where(pos_y, p, 1.0 - p)), -100.0)

    not_p = jnp.logical_not(pos_p)
    not_y = jnp.logical_not(pos_y)
    fp_ind = jnp.logical_and(pos_p, not_y)   # predicted +, label -
    fn_ind = jnp.logical_and(not_p, pos_y)   # predicted -, label +
    tp_ind = jnp.logical_and(pos_p, pos_y)

    zero = jnp.zeros_like(oloss)
    # Six per-label column sums accumulated across the N ("arbitrary") axis.
    # TODO(synk): if a bundle dump shows the VALU saturated on v6e/v7x, these
    # axis-0 sums can be offloaded to the idle MXU via a bf16 ones-vector dot.
    s_ol[...] += jnp.sum(oloss, axis=0, keepdims=True)
    s_fpo[...] += jnp.sum(jnp.where(fp_ind, oloss, zero), axis=0, keepdims=True)
    s_fno[...] += jnp.sum(jnp.where(fn_ind, oloss, zero), axis=0, keepdims=True)
    s_tp[...] += jnp.sum(tp_ind.astype(jnp.float32), axis=0, keepdims=True)
    s_pp[...] += jnp.sum(pos_p.astype(jnp.float32), axis=0, keepdims=True)
    s_py[...] += jnp.sum(pos_y.astype(jnp.float32), axis=0, keepdims=True)

    @pl.when(nj == pl.num_programs(1) - 1)
    def _finalize():
        # Padded sample rows are (p=1, y=1): they add exactly +n_pad_rows to
        # tp / pred-positive / label-positive counts and 0 to everything else.
        tp = s_tp[...] - float(n_pad_rows)
        pp = s_pp[...] - float(n_pad_rows)
        py = s_py[...] - float(n_pad_rows)
        fn = py - tp                      # label +, predicted -
        fp = pp - tp                      # predicted +, label -
        tn = (float(n_real) - py) - fp    # label -, predicted -
        fp_coef = fp / (tn + 1.0)
        fn_coef = fn / (tp + 1.0)
        if gamma != 1.0:  # 0/1 indicators => pow moves onto per-label coefs
            fp_coef = fp_coef ** gamma
            fn_coef = fn_coef ** gamma
        out_ref[...] = s_ol[...] + (alpha / float(n_real)) * (
            fp_coef * s_fpo[...] + fn_coef * s_fno[...])


# ------------------------------- wrapper ------------------------------------
def fec_loss(p, y, *, alpha=100.0, gamma=1.0, thr=0.5, reduction="mean",
             _force_tiles=None):
    """Pallas TPU implementation of FECLoss.forward (reduction='mean')."""
    assert p.ndim == 2 and p.shape == y.shape
    # TODO(synk): reduction='none' (full (N, L) weighted-loss output) would
    # need a second elementwise pass once the per-label coefficients are
    # known; only the module-default 'mean' path is implemented.
    assert reduction == "mean"
    # NOTE: assumes hard 0/1 labels (the module's intended use); soft labels
    # would require the original y*log(p) + (1-y)*log(1-p) formulation.
    n, l = p.shape

    vmem_cap = _vmem_capacity_bytes()
    p_bytes = jnp.dtype(p.dtype).itemsize
    y_bytes = jnp.dtype(y.dtype).itemsize
    if _force_tiles is not None:  # test hook: exercise the N-tiled path
        tile_n, tile_l = _force_tiles
        assert tile_n % 8 == 0 and (tile_l % 128 == 0 or tile_l == l)
        l_pad = l if tile_l == l else _round_up(l, tile_l)
        n_pad = _round_up(n, tile_n)
    else:
        tile_n, tile_l, n_pad, l_pad = _choose_tiles(
            n, l, p_bytes, y_bytes, (vmem_cap * 3) // 5)

    if (n_pad, l_pad) != (n, l):
        # pad with (p=1, y=1): oloss = 0, indicators land only in tp (see the
        # finalize-time constant correction inside the kernel).
        p = jnp.pad(p, ((0, n_pad - n), (0, l_pad - l)), constant_values=1)
        y = jnp.pad(y, ((0, n_pad - n), (0, l_pad - l)), constant_values=1)

    grid = (l_pad // tile_l, n_pad // tile_n)  # (parallel L, arbitrary N)
    kernel = functools.partial(
        _fec_tile_kernel, alpha=float(alpha), gamma=float(gamma),
        thr=float(thr), n_real=n, n_pad_rows=n_pad - n)

    col_sums = pl.pallas_call(
        kernel,
        out_shape=jax.ShapeDtypeStruct((1, l_pad), jnp.float32),
        grid=grid,
        in_specs=[pl.BlockSpec((tile_n, tile_l), lambda li, nj: (nj, li)),
                  pl.BlockSpec((tile_n, tile_l), lambda li, nj: (nj, li))],
        out_specs=pl.BlockSpec((1, tile_l), lambda li, nj: (0, li)),
        scratch_shapes=[pltpu.VMEM((1, tile_l), jnp.float32)] * 6,
        compiler_params=pltpu.CompilerParams(
            dimension_semantics=("parallel", "arbitrary"),
            vmem_limit_bytes=int(vmem_cap * 0.85),
        ),
    )(p, y)

    # finish the 'mean' reduction outside (divide by the ORIGINAL N*L).
    return jnp.sum(col_sums) / float(n * l)


# ------------------------------ reference -----------------------------------
def fec_loss_ref(p, y, *, alpha=100.0, gamma=1.0, thr=0.5):
    """Pure-JAX reference mirroring the PyTorch module exactly."""
    log_p = jnp.maximum(jnp.log(p), -100.0)
    log_1mp = jnp.maximum(jnp.log(1.0 - p), -100.0)
    oloss = -(y * log_p + (1.0 - y) * log_1mp)
    agree = jax.nn.sigmoid(1.0e8 * (p - thr) * (y - thr))
    tp_ind = y * agree
    fp_ind = (1.0 - y) * (1.0 - agree)
    tn_ind = (1.0 - y) * agree
    fn_ind = y * (1.0 - agree)
    tp = jnp.sum(tp_ind, axis=0)
    fp = jnp.sum(fp_ind, axis=0)
    tn = jnp.sum(tn_ind, axis=0)
    fn = jnp.sum(fn_ind, axis=0)
    fp_coef = fp / (tn + 1.0)
    fn_coef = fn / (tp + 1.0)
    fp_w = fp_coef * fp_ind
    fn_w = fn_coef * fn_ind
    penalty = fp_w ** gamma + fn_w ** gamma
    weights = 1.0 + alpha * penalty / p.shape[0]
    return jnp.mean(weights * oloss)


if __name__ == "__main__":
    key = jax.random.PRNGKey(0)
    ks = jax.random.split(key, 6)

    def make_inputs(kp, ky, n, l):
        p = jax.nn.sigmoid(jax.random.normal(kp, (n, l), dtype=jnp.float32))
        y = (jax.random.uniform(ky, (n, l)) > 0.5).astype(jnp.float32)
        return p, y

    # Case 1: tiny single-block shape; y passed in a narrow HBM dtype (bf16).
    p1, y1 = make_inputs(ks[0], ks[1], 8, 16)
    out1 = jax.block_until_ready(fec_loss(p1, y1.astype(jnp.bfloat16)))
    ref1 = fec_loss_ref(p1, y1)
    assert jnp.allclose(out1, ref1, rtol=1e-5, atol=1e-5), (out1, ref1)

    # Case 2: label tiling + zero-contribution L padding (1000 -> 2 x 512),
    # full-N blocks, 2 parallel label tiles.
    p2, y2 = make_inputs(ks[2], ks[3], 32, 1000)
    out2 = jax.block_until_ready(fec_loss(p2, y2))
    ref2 = fec_loss_ref(p2, y2)
    assert jnp.allclose(out2, ref2, rtol=1e-5, atol=1e-5), (out2, ref2)

    # Case 3: forced small tiles -> exercises the 2-D (L, N) grid, the
    # cross-N-tile accumulators and the padded-sample-row correction (30 -> 32).
    p3, y3 = make_inputs(ks[4], ks[5], 30, 1000)
    out3 = jax.block_until_ready(
        fec_loss(p3, y3.astype(jnp.bfloat16), _force_tiles=(16, 128)))
    ref3 = fec_loss_ref(p3, y3)
    assert jnp.allclose(out3, ref3, rtol=1e-5, atol=1e-5), (out3, ref3)

    print("KERNEL_OK")
</pallas_src>

<mosaic_0001>
module attributes {stable_mosaic.version = 11 : i64} {
  func.func @_fec_tile_kernel(%arg0: i32, %arg1: i32, %arg2: memref<8x16xf32, #tpu.memory_space<vmem>>, %arg3: memref<8x16xbf16, #tpu.memory_space<vmem>>, %arg4: memref<1x16xf32, #tpu.memory_space<vmem>>, %arg5: memref<1x16xf32, #tpu.memory_space<vmem>>, %arg6: memref<1x16xf32, #tpu.memory_space<vmem>>, %arg7: memref<1x16xf32, #tpu.memory_space<vmem>>, %arg8: memref<1x16xf32, #tpu.memory_space<vmem>>, %arg9: memref<1x16xf32, #tpu.memory_space<vmem>>, %arg10: memref<1x16xf32, #tpu.memory_space<vmem>>) attributes {dimension_semantics = [#tpu.dimension_semantics<parallel>, #tpu.dimension_semantics<arbitrary>], iteration_bounds = array<i64: 1, 1>, scalar_prefetch = 0 : i64, scratch_operands = 6 : i64, tpu.core_type = #tpu.core_type<tc>, window_params = [{transform_indices = @transform_0, window_bounds = array<i64: 8, 16>}, {transform_indices = @transform_1, window_bounds = array<i64: 8, 16>}, {transform_indices = @transform_2, window_bounds = array<i64: 1, 16>}]} {
    %c0_i32 = arith.constant 0 : i32
    %0 = arith.cmpi eq, %arg1, %c0_i32 : i32
    %1 = arith.extui %0 : i1 to i32
    %c0_i32_0 = arith.constant 0 : i32
    %2 = arith.cmpi ne, %1, %c0_i32_0 : i32
    scf.if %2 {
      %cst_43 = arith.constant 0.000000e+00 : f32
      %64 = vector.broadcast %cst_43 : f32 to vector<1x16xf32>
      %c0_44 = arith.constant 0 : index
      %c0_45 = arith.constant 0 : index
      %65 = vector.load %arg5[%c0_44, %c0_45] : memref<1x16xf32, #tpu.memory_space<vmem>>, vector<1x16xf32>
      tpu.vector_store %arg5[%c0_44, %c0_45], %64 {strides = array<i32>} : memref<1x16xf32, #tpu.memory_space<vmem>>, vector<1x16xf32>,
      %cst_46 = arith.constant 0.000000e+00 : f32
      %66 = vector.broadcast %cst_46 : f32 to vector<1x16xf32>
      %c0_47 = arith.constant 0 : index
      %c0_48 = arith.constant 0 : index
      %67 = vector.load %arg6[%c0_47, %c0_48] : memref<1x16xf32, #tpu.memory_space<vmem>>, vector<1x16xf32>
      tpu.vector_store %arg6[%c0_47, %c0_48], %66 {strides = array<i32>} : memref<1x16xf32, #tpu.memory_space<vmem>>, vector<1x16xf32>,
      %cst_49 = arith.constant 0.000000e+00 : f32
      %68 = vector.broadcast %cst_49 : f32 to vector<1x16xf32>
      %c0_50 = arith.constant 0 : index
      %c0_51 = arith.constant 0 : index
      %69 = vector.load %arg7[%c0_50, %c0_51] : memref<1x16xf32, #tpu.memory_space<vmem>>, vector<1x16xf32>
      tpu.vector_store %arg7[%c0_50, %c0_51], %68 {strides = array<i32>} : memref<1x16xf32, #tpu.memory_space<vmem>>, vector<1x16xf32>,
      %cst_52 = arith.constant 0.000000e+00 : f32
      %70 = vector.broadcast %cst_52 : f32 to vector<1x16xf32>
      %c0_53 = arith.constant 0 : index
      %c0_54 = arith.constant 0 : index
      %71 = vector.load %arg8[%c0_53, %c0_54] : memref<1x16xf32, #tpu.memory_space<vmem>>, vector<1x16xf32>
      tpu.vector_store %arg8[%c0_53, %c0_54], %70 {strides = array<i32>} : memref<1x16xf32, #tpu.memory_space<vmem>>, vector<1x16xf32>,
      %cst_55 = arith.constant 0.000000e+00 : f32
      %72 = vector.broadcast %cst_55 : f32 to vector<1x16xf32>
      %c0_56 = arith.constant 0 : index
      %c0_57 = arith.constant 0 : index
      %73 = vector.load %arg9[%c0_56, %c0_57] : memref<1x16xf32, #tpu.memory_space<vmem>>, vector<1x16xf32>
      tpu.vector_store %arg9[%c0_56, %c0_57], %72 {strides = array<i32>} : memref<1x16xf32, #tpu.memory_space<vmem>>, vector<1x16xf32>,
      %cst_58 = arith.constant 0.000000e+00 : f32
      %74 = vector.broadcast %cst_58 : f32 to vector<1x16xf32>
      %c0_59 = arith.constant 0 : index
      %c0_60 = arith.constant 0 : index
      %75 = vector.load %arg10[%c0_59, %c0_60] : memref<1x16xf32, #tpu.memory_space<vmem>>, vector<1x16xf32>
      tpu.vector_store %arg10[%c0_59, %c0_60], %74 {strides = array<i32>} : memref<1x16xf32, #tpu.memory_space<vmem>>, vector<1x16xf32>,
    } else {
    }
    %c0 = arith.constant 0 : index
    %c0_1 = arith.constant 0 : index
    %3 = vector.load %arg2[%c0, %c0_1] : memref<8x16xf32, #tpu.memory_space<vmem>>, vector<8x16xf32>
    %cst = arith.constant 5.000000e-01 : f32
    %4 = vector.broadcast %cst : f32 to vector<8x16xf32>
    %5 = arith.cmpf ogt, %3, %4 : vector<8x16xf32>
    %c0_2 = arith.constant 0 : index
    %c0_3 = arith.constant 0 : index
    %6 = vector.load %arg3[%c0_2, %c0_3] : memref<8x16xbf16, #tpu.memory_space<vmem>>, vector<8x16xbf16>
    %cst_4 = arith.constant 5.000000e-01 : bf16
    %7 = vector.broadcast %cst_4 : bf16 to vector<8x16xbf16>
    %8 = arith.cmpf ogt, %6, %7 : vector<8x16xbf16>
    %cst_5 = arith.constant 1.000000e+00 : f32
    %9 = vector.broadcast %cst_5 : f32 to vector<8x16xf32>
    %10 = arith.subf %9, %3 : vector<8x16xf32>
    %11 = arith.select %8, %3, %10 : vector<8x16xi1>, vector<8x16xf32>
    %12 = math.log %11 : vector<8x16xf32>
    %cst_6 = arith.constant -1.000000e+02 : f32
    %13 = vector.broadcast %cst_6 : f32 to vector<8x16xf32>
    %14 = arith.maximumf %12, %13 : vector<8x16xf32>
    %cst_7 = arith.constant 0.000000e+00 : f32
    %15 = vector.broadcast %cst_7 : f32 to vector<8x16xf32>
    %16 = arith.subf %15, %14 : vector<8x16xf32>
    %cst_8 = arith.constant dense<true> : vector<8x16xi1>
    %17 = arith.xori %5, %cst_8 : vector<8x16xi1>
    %cst_9 = arith.constant dense<true> : vector<8x16xi1>
    %18 = arith.xori %8, %cst_9 : vector<8x16xi1>
    %19 = arith.andi %5, %18 : vector<8x16xi1>
    %20 = arith.andi %17, %8 : vector<8x16xi1>
    %21 = arith.andi %5, %8 : vector<8x16xi1>
    %cst_10 = arith.constant 0.000000e+00 : f32
    %22 = vector.broadcast %cst_10 : f32 to vector<8x16xf32>
    %c0_11 = arith.constant 0 : index
    %c0_12 = arith.constant 0 : index
    %23 = vector.load %arg5[%c0_11, %c0_12] : memref<1x16xf32, #tpu.memory_space<vmem>>, vector<1x16xf32>
    %cst_13 = arith.constant dense<0.000000e+00> : vector<16xf32>
    %24 = vector.multi_reduction <add>, %16, %cst_13 [0] : vector<8x16xf32> to vector<16xf32>
    %25 = vector.shape_cast %24 : vector<16xf32> to vector<1x16xf32>
    %26 = arith.addf %23, %25 : vector<1x16xf32>
    %c0_14 = arith.constant 0 : index
    %c0_15 = arith.constant 0 : index
    %27 = vector.load %arg5[%c0_14, %c0_15] : memref<1x16xf32, #tpu.memory_space<vmem>>, vector<1x16xf32>
    tpu.vector_store %arg5[%c0_14, %c0_15], %26 {strides = array<i32>} : memref<1x16xf32, #tpu.memory_space<vmem>>, vector<1x16xf32>,
    %c0_16 = arith.constant 0 : index
    %c0_17 = arith.constant 0 : index
    %28 = vector.load %arg6[%c0_16, %c0_17] : memref<1x16xf32, #tpu.memory_space<vmem>>, vector<1x16xf32>
    %29 = arith.select %19, %16, %22 : vector<8x16xi1>, vector<8x16xf32>
    %cst_18 = arith.constant dense<0.000000e+00> : vector<16xf32>
    %30 = vector.multi_reduction <add>, %29, %cst_18 [0] : vector<8x16xf32> to vector<16xf32>
    %31 = vector.shape_cast %30 : vector<16xf32> to vector<1x16xf32>
    %32 = arith.addf %28, %31 : vector<1x16xf32>
    %c0_19 = arith.constant 0 : index
    %c0_20 = arith.constant 0 : index
    %33 = vector.load %arg6[%c0_19, %c0_20] : memref<1x16xf32, #tpu.memory_space<vmem>>, vector<1x16xf32>
    tpu.vector_store %arg6[%c0_19, %c0_20], %32 {strides = array<i32>} : memref<1x16xf32, #tpu.memory_space<vmem>>, vector<1x16xf32>,
    %c0_21 = arith.constant 0 : index
    %c0_22 = arith.constant 0 : index
    %34 = vector.load %arg7[%c0_21, %c0_22] : memref<1x16xf32, #tpu.memory_space<vmem>>, vector<1x16xf32>
    %35 = arith.select %20, %16, %22 : vector<8x16xi1>, vector<8x16xf32>
    %cst_23 = arith.constant dense<0.000000e+00> : vector<16xf32>
    %36 = vector.multi_reduction <add>, %35, %cst_23 [0] : vector<8x16xf32> to vector<16xf32>
    %37 = vector.shape_cast %36 : vector<16xf32> to vector<1x16xf32>
    %38 = arith.addf %34, %37 : vector<1x16xf32>
    %c0_24 = arith.constant 0 : index
    %c0_25 = arith.constant 0 : index
    %39 = vector.load %arg7[%c0_24, %c0_25] : memref<1x16xf32, #tpu.memory_space<vmem>>, vector<1x16xf32>
    tpu.vector_store %arg7[%c0_24, %c0_25], %38 {strides = array<i32>} : memref<1x16xf32, #tpu.memory_space<vmem>>, vector<1x16xf32>,
    %c0_26 = arith.constant 0 : index
    %c0_27 = arith.constant 0 : index
    %40 = vector.load %arg8[%c0_26, %c0_27] : memref<1x16xf32, #tpu.memory_space<vmem>>, vector<1x16xf32>
    %41 = arith.extui %21 : vector<8x16xi1> to vector<8x16xi32>
    %42 = arith.sitofp %41 : vector<8x16xi32> to vector<8x16xf32>
    %cst_28 = arith.constant dense<0.000000e+00> : vector<16xf32>
    %43 = vector.multi_reduction <add>, %42, %cst_28 [0] : vector<8x16xf32> to vector<16xf32>
    %44 = vector.shape_cast %43 : vector<16xf32> to vector<1x16xf32>
    %45 = arith.addf %40, %44 : vector<1x16xf32>
    %c0_29 = arith.constant 0 : index
    %c0_30 = arith.constant 0 : index
    %46 = vector.load %arg8[%c0_29, %c0_30] : memref<1x16xf32, #tpu.memory_space<vmem>>, vector<1x16xf32>
    tpu.vector_store %arg8[%c0_29, %c0_30], %45 {strides = array<i32>} : memref<1x16xf32, #tpu.memory_space<vmem>>, vector<1x16xf32>,
    %c0_31 = arith.constant 0 : index
    %c0_32 = arith.constant 0 : index
    %47 = vector.load %arg9[%c0_31, %c0_32] : memref<1x16xf32, #tpu.memory_space<vmem>>, vector<1x16xf32>
    %48 = arith.extui %5 : vector<8x16xi1> to vector<8x16xi32>
    %49 = arith.sitofp %48 : vector<8x16xi32> to vector<8x16xf32>
    %cst_33 = arith.constant dense<0.000000e+00> : vector<16xf32>
    %50 = vector.multi_reduction <add>, %49, %cst_33 [0] : vector<8x16xf32> to vector<16xf32>
    %51 = vector.shape_cast %50 : vector<16xf32> to vector<1x16xf32>
    %52 = arith.addf %47, %51 : vector<1x16xf32>
    %c0_34 = arith.constant 0 : index
    %c0_35 = arith.constant 0 : index
    %53 = vector.load %arg9[%c0_34, %c0_35] : memref<1x16xf32, #tpu.memory_space<vmem>>, vector<1x16xf32>
    tpu.vector_store %arg9[%c0_34, %c0_35], %52 {strides = array<i32>} : memref<1x16xf32, #tpu.memory_space<vmem>>, vector<1x16xf32>,
    %c0_36 = arith.constant 0 : index
    %c0_37 = arith.constant 0 : index
    %54 = vector.load %arg10[%c0_36, %c0_37] : memref<1x16xf32, #tpu.memory_space<vmem>>, vector<1x16xf32>
    %55 = arith.extui %8 : vector<8x16xi1> to vector<8x16xi32>
    %56 = arith.sitofp %55 : vector<8x16xi32> to vector<8x16xf32>
    %cst_38 = arith.constant dense<0.000000e+00> : vector<16xf32>
    %57 = vector.multi_reduction <add>, %56, %cst_38 [0] : vector<8x16xf32> to vector<16xf32>
    %58 = vector.shape_cast %57 : vector<16xf32> to vector<1x16xf32>
    %59 = arith.addf %54, %58 : vector<1x16xf32>
    %c0_39 = arith.constant 0 : index
    %c0_40 = arith.constant 0 : index
    %60 = vector.load %arg10[%c0_39, %c0_40] : memref<1x16xf32, #tpu.memory_space<vmem>>, vector<1x16xf32>
    tpu.vector_store %arg10[%c0_39, %c0_40], %59 {strides = array<i32>} : memref<1x16xf32, #tpu.memory_space<vmem>>, vector<1x16xf32>,
    %c0_i32_41 = arith.constant 0 : i32
    %61 = arith.cmpi eq, %arg1, %c0_i32_41 : i32
    %62 = arith.extui %61 : i1 to i32
    %c0_i32_42 = arith.constant 0 : i32
    %63 = arith.cmpi ne, %62, %c0_i32_42 : i32
    scf.if %63 {
      %c0_43 = arith.constant 0 : index
      %c0_44 = arith.constant 0 : index
      %64 = vector.load %arg8[%c0_43, %c0_44] : memref<1x16xf32, #tpu.memory_space<vmem>>, vector<1x16xf32>
      %cst_45 = arith.constant 0.000000e+00 : f32
      %65 = vector.broadcast %cst_45 : f32 to vector<1x16xf32>
      %66 = arith.subf %64, %65 : vector<1x16xf32>
      %c0_46 = arith.constant 0 : index
      %c0_47 = arith.constant 0 : index
      %67 = vector.load %arg9[%c0_46, %c0_47] : memref<1x16xf32, #tpu.memory_space<vmem>>, vector<1x16xf32>
      %cst_48 = arith.constant 0.000000e+00 : f32
      %68 = vector.broadcast %cst_48 : f32 to vector<1x16xf32>
      %69 = arith.subf %67, %68 : vector<1x16xf32>
      %c0_49 = arith.constant 0 : index
      %c0_50 = arith.constant 0 : index
      %70 = vector.load %arg10[%c0_49, %c0_50] : memref<1x16xf32, #tpu.memory_space<vmem>>, vector<1x16xf32>
      %cst_51 = arith.constant 0.000000e+00 : f32
      %71 = vector.broadcast %cst_51 : f32 to vector<1x16xf32>
      %72 = arith.subf %70, %71 : vector<1x16xf32>
      %73 = arith.subf %72, %66 : vector<1x16xf32>
      %74 = arith.subf %69, %66 : vector<1x16xf32>
      %cst_52 = arith.constant 8.000000e+00 : f32
      %75 = vector.broadcast %cst_52 : f32 to vector<1x16xf32>
      %76 = arith.subf %75, %72 : vector<1x16xf32>
      %77 = arith.subf %76, %74 : vector<1x16xf32>
      %cst_53 = arith.constant 1.000000e+00 : f32
      %78 = vector.broadcast %cst_53 : f32 to vector<1x16xf32>
      %79 = arith.addf %77, %78 : vector<1x16xf32>
      %80 = arith.divf %74, %79 : vector<1x16xf32>
      %cst_54 = arith.constant 1.000000e+00 : f32
      %81 = vector.broadcast %cst_54 : f32 to vector<1x16xf32>
      %82 = arith.addf %66, %81 : vector<1x16xf32>
      %83 = arith.divf %73, %82 : vector<1x16xf32>
      %c0_55 = arith.constant 0 : index
      %c0_56 = arith.constant 0 : index
      %84 = vector.load %arg5[%c0_55, %c0_56] : memref<1x16xf32, #tpu.memory_space<vmem>>, vector<1x16xf32>
      %c0_57 = arith.constant 0 : index
      %c0_58 = arith.constant 0 : index
      %85 = vector.load %arg6[%c0_57, %c0_58] : memref<1x16xf32, #tpu.memory_space<vmem>>, vector<1x16xf32>
      %86 = arith.mulf %80, %85 : vector<1x16xf32>
      %c0_59 = arith.constant 0 : index
      %c0_60 = arith.constant 0 : index
      %87 = vector.load %arg7[%c0_59, %c0_60] : memref<1x16xf32, #tpu.memory_space<vmem>>, vector<1x16xf32>
      %88 = arith.mulf %83, %87 : vector<1x16xf32>
      %89 = arith.addf %86, %88 : vector<1x16xf32>
      %cst_61 = arith.constant 1.250000e+01 : f32
      %90 = vector.broadcast %cst_61 : f32 to vector<1x16xf32>
      %91 = arith.mulf %90, %89 : vector<1x16xf32>
      %92 = arith.addf %84, %91 : vector<1x16xf32>
      %c0_62 = arith.constant 0 : index
      %c0_63 = arith.constant 0 : index
      %93 = vector.load %arg4[%c0_62, %c0_63] : memref<1x16xf32, #tpu.memory_space<vmem>>, vector<1x16xf32>
      tpu.vector_store %arg4[%c0_62, %c0_63], %92 {strides = array<i32>} : memref<1x16xf32, #tpu.memory_space<vmem>>, vector<1x16xf32>,
    } else {
    }
    return
  }
  func.func @transform_0(%arg0: i32, %arg1: i32) -> (i32, i32) {
    %c0_i32 = arith.constant 0 : i32
    return %arg1, %arg0 : i32, i32
  }
  func.func @transform_1(%arg0: i32, %arg1: i32) -> (i32, i32) {
    %c0_i32 = arith.constant 0 : i32
    return %arg1, %arg0 : i32, i32
  }
  func.func @transform_2(%arg0: i32, %arg1: i32) -> (i32, i32) {
    %c0_i32 = arith.constant 0 : i32
    %c0_i32_0 = arith.constant 0 : i32
    return %c0_i32, %arg0 : i32, i32
  }
}

</mosaic_0001>

<llo_original>
// kernel: tpu_custom_call.1
$region0: #{tpu_custom_call.1}
  #allocation0 [shape = 'u32[]', space=smem, size = 0x4, offset = 0x4, fixed_abs, tag = 'smem constant byte address 0x4 - core index']
  #allocation1 [shape = 'u32[72,128]{1,0:T(1,128)}', space=vmem, size = 0x9000, scoped, tag = 'internal scratch']
  #allocation2 [shape = 'f32[1,16]{1,0:T(1,128)}', space=vmem, size = 0x200, scoped, tag = 'scratch operand']
  #allocation3 [shape = 'f32[1,16]{1,0:T(1,128)}', space=vmem, size = 0x200, scoped, tag = 'scratch operand']
  #allocation4 [shape = 'f32[1,16]{1,0:T(1,128)}', space=vmem, size = 0x200, scoped, tag = 'scratch operand']
  #allocation5 [shape = 'f32[1,16]{1,0:T(1,128)}', space=vmem, size = 0x200, scoped, tag = 'scratch operand']
  #allocation6 [shape = 'f32[1,16]{1,0:T(1,128)}', space=vmem, size = 0x200, scoped, tag = 'scratch operand']
  #allocation7 [shape = 'f32[1,16]{1,0:T(1,128)}', space=vmem, size = 0x200, scoped, tag = 'scratch operand']
  %s0 = inlined_call_operand.hbm [shape: f32[8,16], index: 0, kind: input, shape index: {}]
  %s1 = inlined_call_operand.hbm [shape: bf16[8,16], index: 1, kind: input, shape index: {}]
  %s2 = inlined_call_operand.hbm [shape: f32[1,16], index: 2, kind: output, shape index: {}]
  %s3 = sld [smem:[#allocation0]]
  $region34: #{tpu_custom_call.1} parent=0
    _
  %s5 = ssub.s32 1, %s3
  %s6 = scalar_select 0, %s5, %s3
  $region1: #{tpu_custom_call.1} parent=0
    #allocation8 [shape = 'u8[4096]{0}', space=vmem, size = 0x1000, scoped, tag = 'input window, operand 0, single buffered']
    #allocation9 [shape = 's32[1]{0}', space=sflag, size = 0x4, scoped, tag = 'scoped memory for tpu_custom_call.1']
    #allocation10 [shape = 's32[1]{0}', space=sflag, size = 0x4, scoped, tag = 'scoped memory for tpu_custom_call.1']
    #allocation11 [shape = 'u8[2048]{0}', space=vmem, size = 0x800, scoped, tag = 'input window, operand 1, single buffered']
    #allocation12 [shape = 's32[1]{0}', space=sflag, size = 0x4, scoped, tag = 'scoped memory for tpu_custom_call.1']
    #allocation13 [shape = 'u8[512]{0}', space=vmem, size = 0x400, scoped, tag = 'output window, operand 0, single buffered']
    %7 = vsyncpa [#allocation9], 0
    %8 = vsyncpa [#allocation12], 0
    %9 = vsyncpa [#allocation10], 0
    // Predicated region
    $region2: #{tpu_custom_call.1} parent=1 // pred_check
      _
    $region3: #{tpu_custom_call.1} parent=1 // pred_check_branch
      %11 = sbr.rel (0) target = $region5
    $region4: #{tpu_custom_call.1} parent=1 // pred_region
      %13 = vsyncadd [#allocation9], 0
      %s15 = sshll.u32 %s0, 4
      %s16 = int_to_ptr.hbm [resolvable:$true] %s15
      %s17 = sshll.u32 [#allocation8], 4
      %s18 = int_to_ptr.vmem [resolvable:$true] %s17
      %20 = dma.hbm_to_vmem [thread:$0]  %s16, 128, %s18, [#allocation9]
    $region5: #{tpu_custom_call.1} parent=1 // pred_fallthru
      _
    // Predicated region
    $region6: #{tpu_custom_call.1} parent=1 // pred_check
      _
    $region7: #{tpu_custom_call.1} parent=1 // pred_check_branch
      %22 = sbr.rel (0) target = $region9
    $region8: #{tpu_custom_call.1} parent=1 // pred_region
      %24 = vsyncadd [#allocation12], 0
      %s26 = sshll.u32 %s1, 4
      %s27 = int_to_ptr.hbm [resolvable:$true] %s26
      %s28 = sshll.u32 [#allocation11], 4
      %s29 = int_to_ptr.vmem [resolvable:$true] %s28
      %31 = dma.hbm_to_vmem [thread:$0]  %s27, 64, %s29, [#allocation12]
    $region9: #{tpu_custom_call.1} parent=1 // pred_fallthru
      _
    // Predicated region
    $region10: #{tpu_custom_call.1} parent=1 // pred_check
      _
    $region11: #{tpu_custom_call.1} parent=1 // pred_check_branch
      %33 = sbr.rel (0) target = $region13
    $region12: #{tpu_custom_call.1} parent=1 // pred_region
      %35 = dma.done [#allocation9], 128
    $region13: #{tpu_custom_call.1} parent=1 // pred_fallthru
      _
    // Predicated region
    $region14: #{tpu_custom_call.1} parent=1 // pred_check
      _
    $region15: #{tpu_custom_call.1} parent=1 // pred_check_branch
      %37 = sbr.rel (0) target = $region17
    $region16: #{tpu_custom_call.1} parent=1 // pred_region
      %39 = dma.done [#allocation12], 64
    $region17: #{tpu_custom_call.1} parent=1 // pred_fallthru
      _
    %p40 = scmp.eq.s32.totalorder 0, 0
    // Predicated region
    $region18: #{tpu_custom_call.1} parent=1 // pred_check
      %p41 = pneg %p40
    $region19: #{tpu_custom_call.1} parent=1 // pred_check_branch
      %43 = sbr.rel (%p41) target = $region21
    $region20: #{tpu_custom_call.1} parent=1 // pred_region
      %vm44 = vcmask 122880
      %45 = vst.msk [vmem:[#allocation2] sm:$0x1] %vm44, 0.0
      %46 = vst.msk [vmem:[#allocation3] sm:$0x1] %vm44, 0.0
      %47 = vst.msk [vmem:[#allocation4] sm:$0x1] %vm44, 0.0
      %48 = vst.msk [vmem:[#allocation5] sm:$0x1] %vm44, 0.0
      %49 = vst.msk [vmem:[#allocation6] sm:$0x1] %vm44, 0.0
      %50 = vst.msk [vmem:[#allocation7] sm:$0x1] %vm44, 0.0
    $region21: #{tpu_custom_call.1} parent=1 // pred_fallthru
      _
    %v51 = vld [vmem:[#allocation8] sm:$0xff]
    %vm52 = vcmp.gt.f32.partialorder %v51, 0.5
    %v53 = vld [vmem:[#allocation11] sm:$0xf]
    %v54 = vunpack.c.l.bf16 %v53
    %vm55 = vcmp.gt.f32.partialorder %v54, 0.5
    %v56 = vsub.f32 1.0, %v51
    %v57 = vsel %vm55, %v51, %v56
    %v58 = vlog2.pop %v57
    %v59 = vmul.f32 %v58, 0.6931472
    %v60 = vmax.f32 %v59, -100.0
    %v61 = vsub.f32 0.0, %v60
    %vm62 = vmxor %vm52, 1
    %vm63 = vmxor %vm55, 1
    %vm64 = vmand %vm52, %vm63
    %vm65 = vmand %vm62, %vm55
    %vm66 = vmand %vm52, %vm55
    %v67 = vld [vmem:[#allocation2] sm:$0x1]
    %vm68 = vcmask 130048
    %v69 = vsel %vm68, %v61, 0.0
    %v70 = vrot.slane %v69, 4
    %v71 = vadd.f32 %v69, %v70
    %v72 = vrot.slane %v71, 2
    %v73 = vadd.f32 %v71, %v72
    %v74 = vrot.slane %v73, 1
    %v75 = vadd.f32 %v73, %v74
    %v76 = vadd.f32 %v67, %v75
    %vm77 = vcmask 122880
    %78 = vst.msk [vmem:[#allocation2] sm:$0x1] %vm77, %v76
    %v79 = vld [vmem:[#allocation3] sm:$0x1]
    %v80 = vsel %vm64, %v61, 0.0
    %v81 = vsel %vm68, %v80, 0.0
    %v82 = vrot.slane %v81, 4
    %v83 = vadd.f32 %v81, %v82
    %v84 = vrot.slane %v83, 2
    %v85 = vadd.f32 %v83, %v84
    %v86 = vrot.slane %v85, 1
    %v87 = vadd.f32 %v85, %v86
    %v88 = vadd.f32 %v79, %v87
    %89 = vst.msk [vmem:[#allocation3] sm:$0x1] %vm77, %v88
    %v90 = vld [vmem:[#allocation4] sm:$0x1]
    %v91 = vsel %vm65, %v61, 0.0
    %v92 = vsel %vm68, %v91, 0.0
    %v93 = vrot.slane %v92, 4
    %v94 = vadd.f32 %v92, %v93
    %v95 = vrot.slane %v94, 2
    %v96 = vadd.f32 %v94, %v95
    %v97 = vrot.slane %v96, 1
    %v98 = vadd.f32 %v96, %v97
    %v99 = vadd.f32 %v90, %v98
    %100 = vst.msk [vmem:[#allocation4] sm:$0x1] %vm77, %v99
    %v101 = vld [vmem:[#allocation5] sm:$0x1]
    %v102 = vsel %vm66, 1, 0
    %v103 = vcvt.s32.f32 %v102
    %v104 = vsel %vm68, %v103, 0.0
    %v105 = vrot.slane %v104, 4
    %v106 = vadd.f32 %v104, %v105
    %v107 = vrot.slane %v106, 2
    %v108 = vadd.f32 %v106, %v107
    %v109 = vrot.slane %v108, 1
    %v110 = vadd.f32 %v108, %v109
    %v111 = vadd.f32 %v101, %v110
    %112 = vst.msk [vmem:[#allocation5] sm:$0x1] %vm77, %v111
    %v113 = vld [vmem:[#allocation6] sm:$0x1]
    %v114 = vsel %vm52, 1, 0
    %v115 = vcvt.s32.f32 %v114
    %v116 = vsel %vm68, %v115, 0.0
    %v117 = vrot.slane %v116, 4
    %v118 = vadd.f32 %v116, %v117
    %v119 = vrot.slane %v118, 2
    %v120 = vadd.f32 %v118, %v119
    %v121 = vrot.slane %v120, 1
    %v122 = vadd.f32 %v120, %v121
    %v123 = vadd.f32 %v113, %v122
    %124 = vst.msk [vmem:[#allocation6] sm:$0x1] %vm77, %v123
    %v125 = vld [vmem:[#allocation7] sm:$0x1]
    %v126 = vsel %vm55, 1, 0
    %v127 = vcvt.s32.f32 %v126
    %v128 = vsel %vm68, %v127, 0.0
    %v129 = vrot.slane %v128, 4
    %v130 = vadd.f32 %v128, %v129
    %v131 = vrot.slane %v130, 2
    %v132 = vadd.f32 %v130, %v131
    %v133 = vrot.slane %v132, 1
    %v134 = vadd.f32 %v132, %v133
    %v135 = vadd.f32 %v125, %v134
    %136 = vst.msk [vmem:[#allocation7] sm:$0x1] %vm77, %v135
    // Predicated region
    $region22: #{tpu_custom_call.1} parent=1 // pred_check
      %p137 = pneg %p40
    $region23: #{tpu_custom_call.1} parent=1 // pred_check_branch
      %139 = sbr.rel (%p137) target = $region25
    $region24: #{tpu_custom_call.1} parent=1 // pred_region
      %v140 = vld [vmem:[#allocation5] sm:$0x1]
      %v141 = vld [vmem:[#allocation6] sm:$0x1]
      %v142 = vld [vmem:[#allocation7] sm:$0x1]
      %v143 = vsub.f32 %v142, %v140
      %v144 = vsub.f32 %v141, %v140
      %v145 = vsub.f32 8.0, %v142
      %v146 = vsub.f32 %v145, %v144
      %v147 = vadd.f32 %v146, 1.0
      %v148 = vrcp.pop %v147
      %v149 = vmul.f32 %v147, %v148
      %v150 = vsub.f32 1.0, %v149
      %v151 = vmul.f32 %v148, %v150
      %v152 = vadd.f32 %v148, %v151
      %vm153 = vweird.f32 %v147
      %vm154 = vweird.f32 %v148
      %vm155 = vmor %vm153, %vm154
      %v156 = vsel %vm155, %v148, %v152
      %v157 = vand.u32 2147483647, %v147
      %vm158 = vcmp.eq.f32.partialorder %v157, 8.507059e+37
      %v159 = vand.u32 %v147, 2147483648
      %v160 = vor.u32 1.1754944e-38, %v159
      %v161 = vsel %vm158, %v160, %v156
      %v162 = vmul.f32 %v144, %v161
      %v163 = vadd.f32 %v140, 1.0
      %v164 = vrcp.pop %v163
      %v165 = vmul.f32 %v163, %v164
      %v166 = vsub.f32 1.0, %v165
      %v167 = vmul.f32 %v164, %v166
      %v168 = vadd.f32 %v164, %v167
      %vm169 = vweird.f32 %v163
      %vm170 = vweird.f32 %v164
      %vm171 = vmor %vm169, %vm170
      %v172 = vsel %vm171, %v164, %v168
      %v173 = vand.u32 2147483647, %v163
      %vm174 = vcmp.eq.f32.partialorder %v173, 8.507059e+37
      %v175 = vand.u32 %v163, 2147483648
      %v176 = vor.u32 1.1754944e-38, %v175
      %v177 = vsel %vm174, %v176, %v172
      %v178 = vmul.f32 %v143, %v177
      %v179 = vld [vmem:[#allocation2] sm:$0x1]
      %v180 = vld [vmem:[#allocation3] sm:$0x1]
      %v181 = vmul.f32 %v162, %v180
      %v182 = vld [vmem:[#allocation4] sm:$0x1]
      %v183 = vmul.f32 %v178, %v182
      %v184 = vadd.f32 %v181, %v183
      %v185 = vmul.f32 %v184, 12.5
      %v186 = vadd.f32 %v179, %v185
      %187 = vst.msk [vmem:[#allocation13] sm:$0x1] %vm77, %v186
    $region25: #{tpu_custom_call.1} parent=1 // pred_fallthru
      _
    // Predicated region
    $region26: #{tpu_custom_call.1} parent=1 // pred_check
      _
    $region27: #{tpu_custom_call.1} parent=1 // pred_check_branch
      %189 = sbr.rel (0) target = $region29
    $region28: #{tpu_custom_call.1} parent=1 // pred_region
      %191 = vsyncadd [#allocation10], 0
      %s193 = sshll.u32 [#allocation13], 4
      %s194 = int_to_ptr.vmem [resolvable:$true] %s193
      %s195 = sshll.u32 %s2, 4
      %s196 = int_to_ptr.hbm [resolvable:$true] %s195
      %198 = dma.vmem_to_hbm [thread:$0]  %s194, 16, %s196, [#allocation10]
    $region29: #{tpu_custom_call.1} parent=1 // pred_fallthru
      _
    // Predicated region
    $region30: #{tpu_custom_call.1} parent=1 // pred_check
      _
    $region31: #{tpu_custom_call.1} parent=1 // pred_check_branch
      %200 = sbr.rel (0) target = $region33
    $region32: #{tpu_custom_call.1} parent=1 // pred_region
      %202 = dma.done [#allocation10], 16
    $region33: #{tpu_custom_call.1} parent=1 // pred_fallthru
      _
    %203 = vsyncpa [#allocation9], 1
    %204 = vsyncpa [#allocation12], 1
    %205 = vsyncpa [#allocation10], 1

</llo_original>
